<compile_context>
chip_gen: v7x
topology: tpu7x:2x2x1
jax: 0.10.0
libtpu: 0.0.40
codegen_flags: <defaults>
</compile_context>

<pallas_src>
import functools

import jax
import jax.numpy as jnp
from jax.experimental import pallas as pl
from jax.experimental.pallas import tpu as pltpu


def _cdiv(a: int, b: int) -> int:
    return (a + b - 1) // b


# ---------------------------------------------------------------------------
# Fused multi-tap GEMM + folded-BN bias + ReLU kernel (one batch element per
# grid step).
# ---------------------------------------------------------------------------
def _make_tap_kernel(groups):
    """groups: per output phase, a tuple of (tap_idx, input_slab_idx, offset)."""

    def kernel(x_ref, w_ref, b_ref, o_ref):
        # x_ref: (S_in, C_in, Lh)    halo-padded activation slabs (bf16/f32)
        # w_ref: (T,    C_out, C_in) per-tap weights, BN scale pre-folded
        # b_ref: (C_out, 1)          folded BN bias (f32)
        # o_ref: (G,    C_out, Lm)   output phases, channel-major, spatial lanes
        lm = o_ref.shape[-1]
        c_out = o_ref.shape[1]
        bias = b_ref[...]
        for g, taps in enumerate(groups):
            acc = None
            for (t, si, off) in taps:
                contrib = jnp.dot(w_ref[t], x_ref[si, :, off:off + lm],
                                  preferred_element_type=jnp.float32)
                acc = contrib if acc is None else acc + contrib
            if acc is None:                       # empty phase (K < stride)
                acc = jnp.zeros((c_out, lm), jnp.float32)
            o_ref[g] = jnp.maximum(acc + bias, 0.0).astype(o_ref.dtype)

    return kernel


def _fused_layer_call(xh, w_taps, bias, groups, lm, c_out, out_dtype):
    n, s_in, c_in, lh = xh.shape
    t = w_taps.shape[0]
    g = len(groups)
    return pl.pallas_call(
        _make_tap_kernel(groups),
        out_shape=jax.ShapeDtypeStruct((n, g, c_out, lm), out_dtype),
        grid_spec=pltpu.PrefetchScalarGridSpec(
            num_scalar_prefetch=0,
            grid=(n,),
            in_specs=[
                # per-batch activation slabs (N squeezed off the kernel ref)
                pl.BlockSpec((None, s_in, c_in, lh), lambda i: (i, 0, 0, 0)),
                # tap weights + bias: resident across all grid steps
                pl.BlockSpec((t, c_out, c_in), lambda i: (0, 0, 0)),
                pl.BlockSpec((c_out, 1), lambda i: (0, 0)),
            ],
            out_specs=pl.BlockSpec((None, g, c_out, lm), lambda i: (i, 0, 0, 0)),
        ),
        compiler_params=pltpu.CompilerParams(
            dimension_semantics=("parallel",),
        ),
    )(xh, w_taps, bias)


# ---------------------------------------------------------------------------
# ConvOrDeconv layer forward (conv/deconv + BN(eval, folded) + ReLU)
# ---------------------------------------------------------------------------
def conv_or_deconv_layer(x, w, gamma, beta, mean, var, *, ks, stride,
                         deconv=False, eps=1e-5, mxu_dtype=jnp.bfloat16):
    """x: (N, C_in, L) float32.  Returns (N, C_out, L_out) float32."""
    n, c_in, length = x.shape
    pad = ks // 2

    # Eval-mode BatchNorm folded: scale goes into the weights, bias in-kernel.
    scale = gamma / jnp.sqrt(var + eps)
    bias = (beta - mean * scale).reshape(-1, 1).astype(jnp.float32)

    if not deconv:
        # nn.Conv1d: w (C_out, C_in, K), padding = K//2, stride s, no bias.
        c_out = w.shape[0]
        l_out = (length + 2 * pad - ks) // stride + 1
        qm = (ks - 1) // stride
        lh = max(l_out + qm, _cdiv(pad + length, stride))
        right = stride * lh - pad - length                       # >= 0
        x_pad = jnp.pad(x, ((0, 0), (0, 0), (pad, right)))
        if stride == 1:
            xh = x_pad[:, None]                                  # (N,1,C_in,Lh)
        else:
            # polyphase split of the padded input:
            #   xh[n, r, c, m] = x_pad[n, c, s*m + r]
            xh = x_pad.reshape(n, c_in, lh, stride).transpose(0, 3, 1, 2)
        w_taps = jnp.moveaxis(w, -1, 0)                          # (K,C_out,C_in)
        # out[:, l] = sum_k W_k @ x_pad[:, s*l + k]; with k = s*q + r this is
        # W_k @ xh[r, :, l + q]  -> taps (k, slab=r, offset=q), one output phase.
        groups = (tuple((k, k % stride, k // stride) for k in range(ks)),)
        lm = l_out
    else:
        # nn.ConvTranspose1d: w (C_in, C_out, K), padding = K//2,
        # output_padding = s//2, no bias.  Polyphase OUTPUT decomposition:
        #   y[s*m + p] = sum_{k': (p + k' - base) % s == 0} wf[k'] @ x[m + d],
        #   wf[k'] = w[:, :, K-1-k']^T,  d = (p + k' - base)//s,  base = K-1-P.
        c_out = w.shape[1]
        out_pad = stride // 2
        l_out = (length - 1) * stride - 2 * pad + ks + out_pad
        w_taps = jnp.flip(w, axis=-1).transpose(2, 1, 0)         # (K,C_out,C_in)
        base = ks - 1 - pad
        tap_list = []                                            # (k', p, d)
        for p in range(stride):
            for kk in range(ks):
                if (p + kk - base) % stride == 0:
                    tap_list.append((kk, p, (p + kk - base) // stride))
        off0 = min(0, min(d for _, _, d in tap_list))
        d_max = max(d for _, _, d in tap_list)
        left = -off0
        lm = _cdiv(l_out, stride)
        right = max(0, (lm - 1 + d_max - off0) - (left + length - 1))
        x_pad = jnp.pad(x, ((0, 0), (0, 0), (left, right)))
        xh = x_pad[:, None]                                      # (N,1,C_in,Lh)
        groups = tuple(
            tuple((kk, 0, d - off0) for (kk, p, d) in tap_list if p == pp)
            for pp in range(stride))

    w_scaled = (w_taps * scale[None, :, None]).astype(mxu_dtype)
    out = _fused_layer_call(xh.astype(mxu_dtype), w_scaled, bias, groups,
                            lm, c_out, jnp.float32)              # (N,G,C_out,Lm)

    if len(groups) == 1:
        return out[:, 0]                                         # Lm == L_out
    # interleave deconv output phases: y[:, :, s*m + p] = out[:, p, :, m]
    y = out.transpose(0, 2, 3, 1).reshape(n, c_out, lm * len(groups))
    return y[:, :, :l_out]


def conv_or_deconv_block(x, params, ks_list, s_list, deconv=False,
                         mxu_dtype=jnp.bfloat16):
    for p, ks, s in zip(params, ks_list, s_list):
        x = conv_or_deconv_layer(x, p["w"], p["gamma"], p["beta"], p["mean"],
                                 p["var"], ks=ks, stride=s, deconv=deconv,
                                 mxu_dtype=mxu_dtype)
    return x


# ---------------------------------------------------------------------------
# Pure-JAX reference (lax conv, f32) for correctness checking
# ---------------------------------------------------------------------------
def _ref_layer(x, w, gamma, beta, mean, var, *, ks, stride, deconv, eps=1e-5):
    pad = ks // 2
    if not deconv:
        y = jax.lax.conv_general_dilated(
            x, w, window_strides=(stride,), padding=[(pad, pad)],
            dimension_numbers=("NCH", "OIH", "NCH"))
    else:
        out_pad = stride // 2
        w_conv = jnp.flip(w, axis=-1).transpose(1, 0, 2)
        y = jax.lax.conv_general_dilated(
            x, w_conv, window_strides=(1,),
            padding=[(ks - 1 - pad, ks - 1 - pad + out_pad)],
            lhs_dilation=(stride,),
            dimension_numbers=("NCH", "OIH", "NCH"))
    y = (y - mean[None, :, None]) / jnp.sqrt(var[None, :, None] + eps)
    y = gamma[None, :, None] * y + beta[None, :, None]
    return jnp.maximum(y, 0.0)


def _ref_block(x, params, ks_list, s_list, deconv=False):
    for p, ks, s in zip(params, ks_list, s_list):
        x = _ref_layer(x, p["w"], p["gamma"], p["beta"], p["mean"], p["var"],
                       ks=ks, stride=s, deconv=deconv)
    return x


# ---------------------------------------------------------------------------
# Parameter construction
# ---------------------------------------------------------------------------
def _init_layer(key, cin, cout, ks, deconv):
    kw, kg, kb, km, kv = jax.random.split(key, 5)
    wshape = (cin, cout, ks) if deconv else (cout, cin, ks)
    return dict(
        w=0.2 * jax.random.normal(kw, wshape, jnp.float32),
        gamma=1.0 + 0.1 * jax.random.normal(kg, (cout,), jnp.float32),
        beta=0.1 * jax.random.normal(kb, (cout,), jnp.float32),
        mean=0.1 * jax.random.normal(km, (cout,), jnp.float32),
        var=1.0 + 0.1 * jax.random.uniform(kv, (cout,), jnp.float32),
    )


def init_block_params(key, ch_in, ch_out_list, ks_list, deconv):
    ch_in_list = [ch_in] + list(ch_out_list[:-1])
    params = []
    for cin, cout, ks in zip(ch_in_list, ch_out_list, ks_list):
        key, sub = jax.random.split(key)
        params.append(_init_layer(sub, cin, cout, ks, deconv))
    return key, params


if __name__ == "__main__":
    key = jax.random.PRNGKey(0)
    n_batch, c_in, length = 2, 4, 16
    key, xk = jax.random.split(key)
    x = jax.random.normal(xk, (n_batch, c_in, length), dtype=jnp.float32)

    # Encoder-style block (Conv1d) and decoder-style block (ConvTranspose1d).
    conv_ch, conv_ks, conv_s = [8, 16], [5, 3], [1, 2]
    key, conv_params = init_block_params(key, c_in, conv_ch, conv_ks, deconv=False)
    dec_ch, dec_ks, dec_s = [8, 4], [4, 5], [2, 1]
    key, dec_params = init_block_params(key, 16, dec_ch, dec_ks, deconv=True)

    y_conv_ref = _ref_block(x, conv_params, conv_ks, conv_s, deconv=False)
    y_dec_ref = _ref_block(y_conv_ref, dec_params, dec_ks, dec_s, deconv=True)

    def run(dtype):
        enc = jax.jit(functools.partial(conv_or_deconv_block, ks_list=conv_ks,
                                        s_list=conv_s, deconv=False,
                                        mxu_dtype=dtype))
        dec = jax.jit(functools.partial(conv_or_deconv_block, ks_list=dec_ks,
                                        s_list=dec_s, deconv=True,
                                        mxu_dtype=dtype))
        y1 = jax.block_until_ready(enc(x, conv_params))
        y2 = jax.block_until_ready(dec(y1, dec_params))
        return y1, y2

    # ---- Exactness check: f32 MXU operands -------------------------------
    y1_f32, y2_f32 = run(jnp.float32)
    assert y1_f32.shape == (n_batch, 16, 8), y1_f32.shape
    assert y2_f32.shape == (n_batch, 4, 15), y2_f32.shape
    assert float(jnp.max(jnp.abs(y1_f32 - y_conv_ref))) < 1e-4
    assert float(jnp.max(jnp.abs(y2_f32 - y_dec_ref))) < 1e-4

    # ---- Fast path: bf16 MXU operands, f32 accumulation / BN / ReLU -------
    y1_bf, y2_bf = run(jnp.bfloat16)
    assert y1_bf.shape == (n_batch, 16, 8), y1_bf.shape
    assert y2_bf.shape == (n_batch, 4, 15), y2_bf.shape
    tol1 = 5e-2 * (1.0 + float(jnp.max(jnp.abs(y_conv_ref))))
    tol2 = 5e-2 * (1.0 + float(jnp.max(jnp.abs(y_dec_ref))))
    assert float(jnp.max(jnp.abs(y1_bf - y_conv_ref))) < tol1
    assert float(jnp.max(jnp.abs(y2_bf - y_dec_ref))) < tol2

    print("KERNEL_OK")
</pallas_src>

<mosaic_0001>
module attributes {stable_mosaic.version = 11 : i64} {
  func.func @kernel(%arg0: i32, %arg1: memref<1x1x4x20xf32, #tpu.memory_space<vmem>>, %arg2: memref<5x8x4xf32, #tpu.memory_space<vmem>>, %arg3: memref<8x1xf32, #tpu.memory_space<vmem>>, %arg4: memref<1x1x8x16xf32, #tpu.memory_space<vmem>>) attributes {dimension_semantics = [#tpu.dimension_semantics<parallel>], iteration_bounds = array<i64: 2>, scalar_prefetch = 0 : i64, scratch_operands = 0 : i64, tpu.core_type = #tpu.core_type<tc>, window_params = [{transform_indices = @transform_0, window_bounds = array<i64: 1, 1, 4, 20>}, {pipeline_mode = #tpu.pipeline_mode<synchronous>, transform_indices = @transform_1, window_bounds = array<i64: 5, 8, 4>}, {pipeline_mode = #tpu.pipeline_mode<synchronous>, transform_indices = @transform_2, window_bounds = array<i64: 8, 1>}, {transform_indices = @transform_3, window_bounds = array<i64: 1, 1, 8, 16>}]} {
    %c0 = arith.constant 0 : index
    %c0_0 = arith.constant 0 : index
    %0 = vector.load %arg3[%c0, %c0_0] : memref<8x1xf32, #tpu.memory_space<vmem>>, vector<8x1xf32>
    %c0_1 = arith.constant 0 : index
    %c0_2 = arith.constant 0 : index
    %c0_3 = arith.constant 0 : index
    %1 = vector.load %arg2[%c0_1, %c0_2, %c0_3] : memref<5x8x4xf32, #tpu.memory_space<vmem>>, vector<1x8x4xf32>
    %2 = vector.shape_cast %1 : vector<1x8x4xf32> to vector<8x4xf32>
    %c0_4 = arith.constant 0 : index
    %c0_5 = arith.constant 0 : index
    %c0_6 = arith.constant 0 : index
    %c0_7 = arith.constant 0 : index
    %3 = vector.load %arg1[%c0_4, %c0_5, %c0_6, %c0_7] : memref<1x1x4x20xf32, #tpu.memory_space<vmem>>, vector<1x1x4x16xf32>
    %4 = vector.shape_cast %3 : vector<1x1x4x16xf32> to vector<4x16xf32>
    %cst = arith.constant dense<0.000000e+00> : vector<8x16xf32>
    %5 = tpu.matmul %2, %4, %cst {dimension_numbers = #tpu.dot_dimension_numbers<[1], [0], [0], [1], [0, 0, 1, 1], [], []>} : vector<8x4xf32>, vector<4x16xf32>, vector<8x16xf32> -> vector<8x16xf32>
    %c1 = arith.constant 1 : index
    %c0_8 = arith.constant 0 : index
    %c0_9 = arith.constant 0 : index
    %6 = vector.load %arg2[%c1, %c0_8, %c0_9] : memref<5x8x4xf32, #tpu.memory_space<vmem>>, vector<1x8x4xf32>
    %7 = vector.shape_cast %6 : vector<1x8x4xf32> to vector<8x4xf32>
    %c0_10 = arith.constant 0 : index
    %c0_11 = arith.constant 0 : index
    %c0_12 = arith.constant 0 : index
    %c1_13 = arith.constant 1 : index
    %8 = vector.load %arg1[%c0_10, %c0_11, %c0_12, %c1_13] : memref<1x1x4x20xf32, #tpu.memory_space<vmem>>, vector<1x1x4x16xf32>
    %9 = vector.shape_cast %8 : vector<1x1x4x16xf32> to vector<4x16xf32>
    %cst_14 = arith.constant dense<0.000000e+00> : vector<8x16xf32>
    %10 = tpu.matmul %7, %9, %cst_14 {dimension_numbers = #tpu.dot_dimension_numbers<[1], [0], [0], [1], [0, 0, 1, 1], [], []>} : vector<8x4xf32>, vector<4x16xf32>, vector<8x16xf32> -> vector<8x16xf32>
    %11 = arith.addf %5, %10 : vector<8x16xf32>
    %c2 = arith.constant 2 : index
    %c0_15 = arith.constant 0 : index
    %c0_16 = arith.constant 0 : index
    %12 = vector.load %arg2[%c2, %c0_15, %c0_16] : memref<5x8x4xf32, #tpu.memory_space<vmem>>, vector<1x8x4xf32>
    %13 = vector.shape_cast %12 : vector<1x8x4xf32> to vector<8x4xf32>
    %c0_17 = arith.constant 0 : index
    %c0_18 = arith.constant 0 : index
    %c0_19 = arith.constant 0 : index
    %c2_20 = arith.constant 2 : index
    %14 = vector.load %arg1[%c0_17, %c0_18, %c0_19, %c2_20] : memref<1x1x4x20xf32, #tpu.memory_space<vmem>>, vector<1x1x4x16xf32>
    %15 = vector.shape_cast %14 : vector<1x1x4x16xf32> to vector<4x16xf32>
    %cst_21 = arith.constant dense<0.000000e+00> : vector<8x16xf32>
    %16 = tpu.matmul %13, %15, %cst_21 {dimension_numbers = #tpu.dot_dimension_numbers<[1], [0], [0], [1], [0, 0, 1, 1], [], []>} : vector<8x4xf32>, vector<4x16xf32>, vector<8x16xf32> -> vector<8x16xf32>
    %17 = arith.addf %11, %16 : vector<8x16xf32>
    %c3 = arith.constant 3 : index
    %c0_22 = arith.constant 0 : index
    %c0_23 = arith.constant 0 : index
    %18 = vector.load %arg2[%c3, %c0_22, %c0_23] : memref<5x8x4xf32, #tpu.memory_space<vmem>>, vector<1x8x4xf32>
    %19 = vector.shape_cast %18 : vector<1x8x4xf32> to vector<8x4xf32>
    %c0_24 = arith.constant 0 : index
    %c0_25 = arith.constant 0 : index
    %c0_26 = arith.constant 0 : index
    %c3_27 = arith.constant 3 : index
    %20 = vector.load %arg1[%c0_24, %c0_25, %c0_26, %c3_27] : memref<1x1x4x20xf32, #tpu.memory_space<vmem>>, vector<1x1x4x16xf32>
    %21 = vector.shape_cast %20 : vector<1x1x4x16xf32> to vector<4x16xf32>
    %cst_28 = arith.constant dense<0.000000e+00> : vector<8x16xf32>
    %22 = tpu.matmul %19, %21, %cst_28 {dimension_numbers = #tpu.dot_dimension_numbers<[1], [0], [0], [1], [0, 0, 1, 1], [], []>} : vector<8x4xf32>, vector<4x16xf32>, vector<8x16xf32> -> vector<8x16xf32>
    %23 = arith.addf %17, %22 : vector<8x16xf32>
    %c4 = arith.constant 4 : index
    %c0_29 = arith.constant 0 : index
    %c0_30 = arith.constant 0 : index
    %24 = vector.load %arg2[%c4, %c0_29, %c0_30] : memref<5x8x4xf32, #tpu.memory_space<vmem>>, vector<1x8x4xf32>
    %25 = vector.shape_cast %24 : vector<1x8x4xf32> to vector<8x4xf32>
    %c0_31 = arith.constant 0 : index
    %c0_32 = arith.constant 0 : index
    %c0_33 = arith.constant 0 : index
    %c4_34 = arith.constant 4 : index
    %26 = vector.load %arg1[%c0_31, %c0_32, %c0_33, %c4_34] : memref<1x1x4x20xf32, #tpu.memory_space<vmem>>, vector<1x1x4x16xf32>
    %27 = vector.shape_cast %26 : vector<1x1x4x16xf32> to vector<4x16xf32>
    %cst_35 = arith.constant dense<0.000000e+00> : vector<8x16xf32>
    %28 = tpu.matmul %25, %27, %cst_35 {dimension_numbers = #tpu.dot_dimension_numbers<[1], [0], [0], [1], [0, 0, 1, 1], [], []>} : vector<8x4xf32>, vector<4x16xf32>, vector<8x16xf32> -> vector<8x16xf32>
    %29 = arith.addf %23, %28 : vector<8x16xf32>
    %30 = vector.broadcast %0 : vector<8x1xf32> to vector<8x16xf32>
    %31 = arith.addf %29, %30 : vector<8x16xf32>
    %cst_36 = arith.constant 0.000000e+00 : f32
    %32 = vector.broadcast %cst_36 : f32 to vector<8x16xf32>
    %33 = arith.maximumf %31, %32 : vector<8x16xf32>
    %c0_37 = arith.constant 0 : index
    %c0_38 = arith.constant 0 : index
    %c0_39 = arith.constant 0 : index
    %c0_40 = arith.constant 0 : index
    %34 = vector.load %arg4[%c0_37, %c0_38, %c0_39, %c0_40] : memref<1x1x8x16xf32, #tpu.memory_space<vmem>>, vector<1x1x8x16xf32>
    %35 = vector.shape_cast %34 : vector<1x1x8x16xf32> to vector<8x16xf32>
    %36 = vector.shape_cast %33 : vector<8x16xf32> to vector<1x1x8x16xf32>
    tpu.vector_store %arg4[%c0_37, %c0_38, %c0_39, %c0_40], %36 {strides = array<i32>} : memref<1x1x8x16xf32, #tpu.memory_space<vmem>>, vector<1x1x8x16xf32>,
    return
  }
  func.func @transform_0(%arg0: i32) -> (i32, i32, i32, i32) {
    %c0_i32 = arith.constant 0 : i32
    %c0_i32_0 = arith.constant 0 : i32
    %c0_i32_1 = arith.constant 0 : i32
    %c0_i32_2 = arith.constant 0 : i32
    return %arg0, %c0_i32, %c0_i32_0, %c0_i32_1 : i32, i32, i32, i32
  }
  func.func @transform_1(%arg0: i32) -> (i32, i32, i32) {
    %c0_i32 = arith.constant 0 : i32
    %c0_i32_0 = arith.constant 0 : i32
    %c0_i32_1 = arith.constant 0 : i32
    %c0_i32_2 = arith.constant 0 : i32
    return %c0_i32, %c0_i32_0, %c0_i32_1 : i32, i32, i32
  }
  func.func @transform_2(%arg0: i32) -> (i32, i32) {
    %c0_i32 = arith.constant 0 : i32
    %c0_i32_0 = arith.constant 0 : i32
    %c0_i32_1 = arith.constant 0 : i32
    return %c0_i32, %c0_i32_0 : i32, i32
  }
  func.func @transform_3(%arg0: i32) -> (i32, i32, i32, i32) {
    %c0_i32 = arith.constant 0 : i32
    %c0_i32_0 = arith.constant 0 : i32
    %c0_i32_1 = arith.constant 0 : i32
    %c0_i32_2 = arith.constant 0 : i32
    return %arg0, %c0_i32, %c0_i32_0, %c0_i32_1 : i32, i32, i32, i32
  }
}

module attributes {stable_mosaic.version = 11 : i64} {
  func.func @kernel(%arg0: i32, %arg1: memref<1x2x8x9xf32, #tpu.memory_space<vmem>>, %arg2: memref<3x16x8xf32, #tpu.memory_space<vmem>>, %arg3: memref<16x1xf32, #tpu.memory_space<vmem>>, %arg4: memref<1x1x16x8xf32, #tpu.memory_space<vmem>>) attributes {dimension_semantics = [#tpu.dimension_semantics<parallel>], iteration_bounds = array<i64: 2>, scalar_prefetch = 0 : i64, scratch_operands = 0 : i64, tpu.core_type = #tpu.core_type<tc>, window_params = [{transform_indices = @transform_0, window_bounds = array<i64: 1, 2, 8, 9>}, {pipeline_mode = #tpu.pipeline_mode<synchronous>, transform_indices = @transform_1, window_bounds = array<i64: 3, 16, 8>}, {pipeline_mode = #tpu.pipeline_mode<synchronous>, transform_indices = @transform_2, window_bounds = array<i64: 16, 1>}, {transform_indices = @transform_3, window_bounds = array<i64: 1, 1, 16, 8>}]} {
    %c0 = arith.constant 0 : index
    %c0_0 = arith.constant 0 : index
    %0 = vector.load %arg3[%c0, %c0_0] : memref<16x1xf32, #tpu.memory_space<vmem>>, vector<16x1xf32>
    %c0_1 = arith.constant 0 : index
    %c0_2 = arith.constant 0 : index
    %c0_3 = arith.constant 0 : index
    %1 = vector.load %arg2[%c0_1, %c0_2, %c0_3] : memref<3x16x8xf32, #tpu.memory_space<vmem>>, vector<1x16x8xf32>
    %2 = vector.shape_cast %1 : vector<1x16x8xf32> to vector<16x8xf32>
    %c0_4 = arith.constant 0 : index
    %c0_5 = arith.constant 0 : index
    %c0_6 = arith.constant 0 : index
    %c0_7 = arith.constant 0 : index
    %3 = vector.load %arg1[%c0_4, %c0_5, %c0_6, %c0_7] : memref<1x2x8x9xf32, #tpu.memory_space<vmem>>, vector<1x1x8x8xf32>
    %4 = vector.shape_cast %3 : vector<1x1x8x8xf32> to vector<8x8xf32>
    %cst = arith.constant dense<0.000000e+00> : vector<16x8xf32>
    %5 = tpu.matmul %2, %4, %cst {dimension_numbers = #tpu.dot_dimension_numbers<[1], [0], [0], [1], [0, 0, 1, 1], [], []>} : vector<16x8xf32>, vector<8x8xf32>, vector<16x8xf32> -> vector<16x8xf32>
    %c1 = arith.constant 1 : index
    %c0_8 = arith.constant 0 : index
    %c0_9 = arith.constant 0 : index
    %6 = vector.load %arg2[%c1, %c0_8, %c0_9] : memref<3x16x8xf32, #tpu.memory_space<vmem>>, vector<1x16x8xf32>
    %7 = vector.shape_cast %6 : vector<1x16x8xf32> to vector<16x8xf32>
    %c0_10 = arith.constant 0 : index
    %c1_11 = arith.constant 1 : index
    %c0_12 = arith.constant 0 : index
    %c0_13 = arith.constant 0 : index
    %8 = vector.load %arg1[%c0_10, %c1_11, %c0_12, %c0_13] : memref<1x2x8x9xf32, #tpu.memory_space<vmem>>, vector<1x1x8x8xf32>
    %9 = vector.shape_cast %8 : vector<1x1x8x8xf32> to vector<8x8xf32>
    %cst_14 = arith.constant dense<0.000000e+00> : vector<16x8xf32>
    %10 = tpu.matmul %7, %9, %cst_14 {dimension_numbers = #tpu.dot_dimension_numbers<[1], [0], [0], [1], [0, 0, 1, 1], [], []>} : vector<16x8xf32>, vector<8x8xf32>, vector<16x8xf32> -> vector<16x8xf32>
    %11 = arith.addf %5, %10 : vector<16x8xf32>
    %c2 = arith.constant 2 : index
    %c0_15 = arith.constant 0 : index
    %c0_16 = arith.constant 0 : index
    %12 = vector.load %arg2[%c2, %c0_15, %c0_16] : memref<3x16x8xf32, #tpu.memory_space<vmem>>, vector<1x16x8xf32>
    %13 = vector.shape_cast %12 : vector<1x16x8xf32> to vector<16x8xf32>
    %c0_17 = arith.constant 0 : index
    %c0_18 = arith.constant 0 : index
    %c0_19 = arith.constant 0 : index
    %c1_20 = arith.constant 1 : index
    %14 = vector.load %arg1[%c0_17, %c0_18, %c0_19, %c1_20] : memref<1x2x8x9xf32, #tpu.memory_space<vmem>>, vector<1x1x8x8xf32>
    %15 = vector.shape_cast %14 : vector<1x1x8x8xf32> to vector<8x8xf32>
    %cst_21 = arith.constant dense<0.000000e+00> : vector<16x8xf32>
    %16 = tpu.matmul %13, %15, %cst_21 {dimension_numbers = #tpu.dot_dimension_numbers<[1], [0], [0], [1], [0, 0, 1, 1], [], []>} : vector<16x8xf32>, vector<8x8xf32>, vector<16x8xf32> -> vector<16x8xf32>
    %17 = arith.addf %11, %16 : vector<16x8xf32>
    %18 = vector.broadcast %0 : vector<16x1xf32> to vector<16x8xf32>
    %19 = arith.addf %17, %18 : vector<16x8xf32>
    %cst_22 = arith.constant 0.000000e+00 : f32
    %20 = vector.broadcast %cst_22 : f32 to vector<16x8xf32>
    %21 = arith.maximumf %19, %20 : vector<16x8xf32>
    %c0_23 = arith.constant 0 : index
    %c0_24 = arith.constant 0 : index
    %c0_25 = arith.constant 0 : index
    %c0_26 = arith.constant 0 : index
    %22 = vector.load %arg4[%c0_23, %c0_24, %c0_25, %c0_26] : memref<1x1x16x8xf32, #tpu.memory_space<vmem>>, vector<1x1x16x8xf32>
    %23 = vector.shape_cast %22 : vector<1x1x16x8xf32> to vector<16x8xf32>
    %24 = vector.shape_cast %21 : vector<16x8xf32> to vector<1x1x16x8xf32>
    tpu.vector_store %arg4[%c0_23, %c0_24, %c0_25, %c0_26], %24 {strides = array<i32>} : memref<1x1x16x8xf32, #tpu.memory_space<vmem>>, vector<1x1x16x8xf32>,
    return
  }
  func.func @transform_0(%arg0: i32) -> (i32, i32, i32, i32) {
    %c0_i32 = arith.constant 0 : i32
    %c0_i32_0 = arith.constant 0 : i32
    %c0_i32_1 = arith.constant 0 : i32
    %c0_i32_2 = arith.constant 0 : i32
    return %arg0, %c0_i32, %c0_i32_0, %c0_i32_1 : i32, i32, i32, i32
  }
  func.func @transform_1(%arg0: i32) -> (i32, i32, i32) {
    %c0_i32 = arith.constant 0 : i32
    %c0_i32_0 = arith.constant 0 : i32
    %c0_i32_1 = arith.constant 0 : i32
    %c0_i32_2 = arith.constant 0 : i32
    return %c0_i32, %c0_i32_0, %c0_i32_1 : i32, i32, i32
  }
  func.func @transform_2(%arg0: i32) -> (i32, i32) {
    %c0_i32 = arith.constant 0 : i32
    %c0_i32_0 = arith.constant 0 : i32
    %c0_i32_1 = arith.constant 0 : i32
    return %c0_i32, %c0_i32_0 : i32, i32
  }
  func.func @transform_3(%arg0: i32) -> (i32, i32, i32, i32) {
    %c0_i32 = arith.constant 0 : i32
    %c0_i32_0 = arith.constant 0 : i32
    %c0_i32_1 = arith.constant 0 : i32
    %c0_i32_2 = arith.constant 0 : i32
    return %arg0, %c0_i32, %c0_i32_0, %c0_i32_1 : i32, i32, i32, i32
  }
}

</mosaic_0001>

<llo_original>
// kernel: conv_or_deconv_block.2
$region0: #{conv_or_deconv_block.2}
  #allocation0 [shape = 'u32[]', space=smem, size = 0x4, offset = 0x4, fixed_abs, tag = 'smem constant byte address 0x4 - core index']
  #allocation1 [shape = 'u32[144,128]{1,0:T(1,128)}', space=vmem, size = 0x12000, scoped, tag = 'internal scratch']
  %s0 = inlined_call_operand.vmem [shape: f32[2,1,4,20], index: 0, kind: input, shape index: {}]
  %s1 = inlined_call_operand.vmem [shape: f32[5,8,4], index: 1, kind: input, shape index: {}]
  %s2 = inlined_call_operand.vmem [shape: f32[8,1], index: 2, kind: input, shape index: {}]
  %s3 = inlined_call_operand.vmem [shape: f32[2,1,8,16], index: 3, kind: output, shape index: {}]
  %s4 = sld [smem:[#allocation0]]
  $region45: #{conv_or_deconv_block.2} parent=0
    _
  %s6 = ssub.s32 1, %s4
  %s7 = scalar_select 0, %s6, %s4
  loop: start=0, step=1, limit=4
  $region2: #{conv_or_deconv_block.2} parent=0 // loop_pre_header
    _
  $region3: #{conv_or_deconv_block.2} parent=0 // loop_header
    %s9 = sphi 0, %s13
    %p10 = scmp.ge.s32.totalorder %s9, 4
    %s19 = sphi 0, %s21
    %s22 = sphi 0, %s19
    %s23 = sphi 0, %s22
    %s39 = sphi 0, %s23
    %s43 = sphi 0, %s43
    %s45 = sphi 0, %s43
    %s46 = sphi 0, %s45
    %s60 = sphi 0, %s46
    %s64 = sphi 0, %s64
    %s66 = sphi 0, %s64
    %s67 = sphi 0, %s66
    %s81 = sphi 0, %s67
    %s87 = sphi 0, %s89
    %s90 = sphi 0, %s87
    %s91 = sphi 0, %s90
    %s107 = sphi 0, %s91
  $region4: #{conv_or_deconv_block.2} parent=0 // loop_header_branch
    %12 = sbr.rel (%p10) target = $region8
  $region5: #{conv_or_deconv_block.2} parent=0 // loop_body
    %s14 = ssub.s32 %s9, 1
    %s15 = ssub.s32 %s9, 2
    %s16 = sadd.s32 %s9, 1
    %s17 = ssub.s32 %s9, %s16
    %p18 = scmp.eq.s32.totalorder %s17, 0
    %s20 = sadd.s32 %s19, 1
    %s21 = scalar_select %p18, %s19, %s20
    %p24 = pneg %p18
    %p25 = scmp.eq.s32.totalorder %s9, 1
    %p26 = por %p24, %p25
    %p27 = scmp.ne.s32.totalorder %s19, %s22
    %p28 = scmp.eq.s32.totalorder %s9, 0
    %p29 = por %p27, %p28
    %p30 = scmp.ne.s32.totalorder %s19, %s22
    %p31 = scmp.eq.s32.totalorder %s14, 1
    %p32 = por %p30, %p31
    %p33 = scmp.ne.s32.totalorder %s22, %s23
    %p34 = scmp.eq.s32.totalorder %s14, 0
    %p35 = por %p33, %p34
    %p36 = scmp.ne.s32.totalorder %s22, %s23
    %p37 = scmp.eq.s32.totalorder %s15, 1
    %p38 = por %p36, %p37
    %p40 = scmp.ne.s32.totalorder %s23, %s39
    %p41 = scmp.eq.s32.totalorder %s15, 0
    %p42 = por %p40, %p41
    %s44 = sadd.s32 %s43, 1
    %p47 = scmp.eq.s32.totalorder %s9, 1
    %p48 = scmp.ne.s32.totalorder %s43, %s45
    %p49 = scmp.eq.s32.totalorder %s9, 0
    %p50 = por %p48, %p49
    %p51 = scmp.ne.s32.totalorder %s43, %s45
    %p52 = scmp.eq.s32.totalorder %s14, 1
    %p53 = por %p51, %p52
    %p54 = scmp.ne.s32.totalorder %s45, %s46
    %p55 = scmp.eq.s32.totalorder %s14, 0
    %p56 = por %p54, %p55
    %p57 = scmp.ne.s32.totalorder %s45, %s46
    %p58 = scmp.eq.s32.totalorder %s15, 1
    %p59 = por %p57, %p58
    %p61 = scmp.ne.s32.totalorder %s46, %s60
    %p62 = scmp.eq.s32.totalorder %s15, 0
    %p63 = por %p61, %p62
    %s65 = sadd.s32 %s64, 1
    %p68 = scmp.eq.s32.totalorder %s9, 1
    %p69 = scmp.ne.s32.totalorder %s64, %s66
    %p70 = scmp.eq.s32.totalorder %s9, 0
    %p71 = por %p69, %p70
    %p72 = scmp.ne.s32.totalorder %s64, %s66
    %p73 = scmp.eq.s32.totalorder %s14, 1
    %p74 = por %p72, %p73
    %p75 = scmp.ne.s32.totalorder %s66, %s67
    %p76 = scmp.eq.s32.totalorder %s14, 0
    %p77 = por %p75, %p76
    %p78 = scmp.ne.s32.totalorder %s66, %s67
    %p79 = scmp.eq.s32.totalorder %s15, 1
    %p80 = por %p78, %p79
    %p82 = scmp.ne.s32.totalorder %s67, %s81
    %p83 = scmp.eq.s32.totalorder %s15, 0
    %p84 = por %p82, %p83
    %s85 = ssub.s32 %s9, %s16
    %p86 = scmp.eq.s32.totalorder %s85, 0
    %s88 = sadd.s32 %s87, 1
    %s89 = scalar_select %p86, %s87, %s88
    %p92 = pneg %p86
    %p93 = scmp.eq.s32.totalorder %s9, 1
    %p94 = por %p92, %p93
    %p95 = scmp.ne.s32.totalorder %s87, %s90
    %p96 = scmp.eq.s32.totalorder %s9, 0
    %p97 = por %p95, %p96
    %p98 = scmp.ne.s32.totalorder %s87, %s90
    %p99 = scmp.eq.s32.totalorder %s14, 1
    %p100 = por %p98, %p99
    %p101 = scmp.ne.s32.totalorder %s90, %s91
    %p102 = scmp.eq.s32.totalorder %s14, 0
    %p103 = por %p101, %p102
    %p104 = scmp.ne.s32.totalorder %s90, %s91
    %p105 = scmp.eq.s32.totalorder %s15, 1
    %p106 = por %p104, %p105
    %p108 = scmp.ne.s32.totalorder %s91, %s107
    %p109 = scmp.eq.s32.totalorder %s15, 0
    %p110 = por %p108, %p109
    %p111 = scmp.le.s32.totalorder 1, %s9
    %p112 = scmp.lt.s32.totalorder %s9, 3
    %p113 = pnand %p111, %p112
    %p114 = pneg %p113
    // Predicated region
    $region9: #{conv_or_deconv_block.2} parent=5 // pred_check
      _
    $region10: #{conv_or_deconv_block.2} parent=5 // pred_check_branch
      %116 = sbr.rel (%p113) target = $region12
    $region11: #{conv_or_deconv_block.2} parent=5 // pred_region
      %s117 = ssub.s32 %s9, 1
      // Predicated region
      $region13: #{conv_or_deconv_block.2} parent=11 // pred_check
        %p118 = pneg %p56
      $region14: #{conv_or_deconv_block.2} parent=11 // pred_check_branch
        %120 = sbr.rel (%p118) target = $region16
      $region15: #{conv_or_deconv_block.2} parent=11 // pred_region
        _
      $region16: #{conv_or_deconv_block.2} parent=11 // pred_fallthru
        _
      // Predicated region
      $region17: #{conv_or_deconv_block.2} parent=11 // pred_check
        %p121 = pneg %p77
      $region18: #{conv_or_deconv_block.2} parent=11 // pred_check_branch
        %123 = sbr.rel (%p121) target = $region20
      $region19: #{conv_or_deconv_block.2} parent=11 // pred_region
        _
      $region20: #{conv_or_deconv_block.2} parent=11 // pred_fallthru
        _
    $region12: #{conv_or_deconv_block.2} parent=5 // pred_fallthru
      _
    %p124 = scmp.lt.s32.totalorder %s9, 2
    // Predicated region
    $region21: #{conv_or_deconv_block.2} parent=5 // pred_check
      %p125 = pneg %p124
    $region22: #{conv_or_deconv_block.2} parent=5 // pred_check_branch
      %127 = sbr.rel (%p125) target = $region24
    $region23: #{conv_or_deconv_block.2} parent=5 // pred_region
      // Predicated region
      $region25: #{conv_or_deconv_block.2} parent=23 // pred_check
        %p128 = pneg %p29
      $region26: #{conv_or_deconv_block.2} parent=23 // pred_check_branch
        %130 = sbr.rel (%p128) target = $region28
      $region27: #{conv_or_deconv_block.2} parent=23 // pred_region
        %p131 = scmp.lt.s32.totalorder %s9, 1
        %s132 = scalar_select %p131, %s9, 1
        %s133 = smul.addr %s132, 4
        %s134 = scalar_lea.vmem %s0, %s133
      $region28: #{conv_or_deconv_block.2} parent=23 // pred_fallthru
        _
    $region24: #{conv_or_deconv_block.2} parent=5 // pred_fallthru
      _
    %p135 = scmp.le.s32.totalorder 1, %s9
    %p136 = scmp.lt.s32.totalorder %s9, 3
    %p137 = pnand %p135, %p136
    %p138 = pneg %p137
    // Predicated region
    $region29: #{conv_or_deconv_block.2} parent=5 // pred_check
      _
    $region30: #{conv_or_deconv_block.2} parent=5 // pred_check_branch
      %140 = sbr.rel (%p137) target = $region32
    $region31: #{conv_or_deconv_block.2} parent=5 // pred_region
      %s141 = ssub.s32 %s9, 1
      %p142 = scmp.lt.s32.totalorder %s14, 1
      %s143 = scalar_select %p142, %s14, 1
      %s144 = smul.addr %s143, 4
      %s145 = scalar_lea.vmem %s0, %s144
      %p146 = pneg %p35
      %p147 = pneg %p32
      %p148 = pneg %p56
      %p149 = pneg %p53
      %p150 = pneg %p77
      %p151 = pneg %p74
      %p152 = pneg %p103
      %p153 = pneg %p100
      %p154 = scmp.lt.s32.totalorder %s14, 1
      %s155 = scalar_select %p154, %s14, 1
      %s156 = smul.addr %s155, 8
      %s157 = scalar_lea.vmem %s3, %s156
      %p158 = scmp.lt.s32.totalorder %s14, 1
      %s159 = scalar_select %p158, %s14, 1
      %s160 = smul.addr %s159, 4
      %s161 = scalar_lea.vmem %s0, %s160
      %p162 = scmp.lt.s32.totalorder %s14, 1
      %s163 = scalar_select %p162, %s14, 1
      %s164 = smul.addr %s163, 8
      %s165 = scalar_lea.vmem %s3, %s164
      %v166 = vld [vmem:[%s2] sm:$0xff]
      %v167 = vld [vmem:[%s1] sm:$0xff]
      %v168 = vld [vmem:[%s161] sm:$0xf]
      %s169 = scalar_lea.vmem %s1, 8
      %v170 = vld [vmem:[%s169] sm:$0xff]
      %172 = vrot.lane.b32.xlu0 %v168, 127
      %v173 = vpop.permute.xlu0 %172
      %vm174 = vcmask 31744
      %v176 = vsel %vm174, %v170, 0
      %vm178 = vcmask 1043456
      %v179 = vsel %vm178, %v173, 0
      %181 = vmatprep.subr.mxu0 0.0
      %182 = vmatpush1.msra.mxu0 %v179
      %183 = vmatprep.subr.mxu0 0.0
      %184 = vmatpush1.msra.mxu0 0.0
      %185 = vmatprep.subr.mxu0 0.0
      %186 = vmatpush1.msra.mxu0 0.0
      %187 = vmatprep.subr.mxu0 0.0
      %188 = vmatpush1.msra.mxu0 0.0
      %189 = vmatprep.subr.mxu0 0.0
      %190 = vmatpush1.msra.mxu0 0.0
      %191 = vmatprep.subr.mxu0 0.0
      %192 = vmatpush1.msra.mxu0 0.0
      %193 = vmatprep.subr.mxu0 0.0
      %194 = vmatpush1.msra.mxu0 0.0
      %195 = vmatprep.subr.mxu0 0.0
      %196 = vmatpush1.msra.mxu0 0.0
      %197 = vmatprep.subr.mxu0 0.0
      %198 = vmatpush1.msra.mxu0 0.0
      %199 = vmatprep.subr.mxu0 0.0
      %200 = vmatpush1.msra.mxu0 0.0
      %201 = vmatprep.subr.mxu0 0.0
      %202 = vmatpush1.msra.mxu0 0.0
      %203 = vmatprep.subr.mxu0 0.0
      %204 = vmatpush1.msra.mxu0 0.0
      %205 = vmatprep.subr.mxu0 0.0
      %206 = vmatpush1.msra.mxu0 0.0
      %207 = vmatprep.subr.mxu0 0.0
      %208 = vmatpush1.msra.mxu0 0.0
      %209 = vmatprep.subr.mxu0 0.0
      %210 = vmatpush1.msra.mxu0 0.0
      %211 = vmatprep.subr.mxu0 0.0
      %212 = vmatpush1.msra.mxu0 0.0
      %213 = vmatprep.subr.mxu0 0.0
      %214 = vmatpush1.msra.mxu0 0.0
      %215 = vmatprep.subr.mxu0 0.0
      %216 = vmatpush1.msra.mxu0 0.0
      %217 = vmatprep.subr.mxu0 0.0
      %218 = vmatpush1.msra.mxu0 0.0
      %219 = vmatprep.subr.mxu0 0.0
      %220 = vmatpush1.msra.mxu0 0.0
      %221 = vmatprep.subr.mxu0 0.0
      %222 = vmatpush1.msra.mxu0 0.0
      %223 = vmatprep.subr.mxu0 0.0
      %224 = vmatpush1.msra.mxu0 0.0
      %225 = vmatprep.subr.mxu0 0.0
      %226 = vmatpush1.msra.mxu0 0.0
      %227 = vmatprep.subr.mxu0 0.0
      %228 = vmatpush1.msra.mxu0 0.0
      %229 = vmatprep.subr.mxu0 0.0
      %230 = vmatpush1.msra.mxu0 0.0
      %231 = vmatprep.subr.mxu0 0.0
      %232 = vmatpush1.msra.mxu0 0.0
      %233 = vmatprep.subr.mxu0 0.0
      %234 = vmatpush1.msra.mxu0 0.0
      %235 = vmatprep.subr.mxu0 0.0
      %236 = vmatpush1.msra.mxu0 0.0
      %237 = vmatprep.subr.mxu0 0.0
      %238 = vmatpush1.msra.mxu0 0.0
      %239 = vmatprep.subr.mxu0 0.0
      %240 = vmatpush1.msra.mxu0 0.0
      %241 = vmatprep.subr.mxu0 0.0
      %242 = vmatpush1.msra.mxu0 0.0
      %243 = vmatprep.subr.mxu0 0.0
      %244 = vmatpush1.msra.mxu0 0.0
      %245 = vmatprep.mubr.f32.mxu0 0.0
      %246 = vmatmul.mubr.f32.gmra.mrb[0].mxu0 %v176
      %v247 = vpop.f32.mrb[0].mxu0
      %v248 = vadd.f32 0.0, %v247
      %v249 = vpop.f32.mrb[0].mxu0
      %250 = vdwg.mxu0
      %v252 = vsel %vm174, %v167, 0
      %v254 = vsel %vm178, %v168, 0
      %256 = vmatprep.subr.mxu0 0.0
      %257 = vmatpush1.msra.mxu0 %v254
      %258 = vmatprep.subr.mxu0 0.0
      %259 = vmatpush1.msra.mxu0 0.0
      %260 = vmatprep.subr.mxu0 0.0
      %261 = vmatpush1.msra.mxu0 0.0
      %262 = vmatprep.subr.mxu0 0.0
      %263 = vmatpush1.msra.mxu0 0.0
      %264 = vmatprep.subr.mxu0 0.0
      %265 = vmatpush1.msra.mxu0 0.0
      %266 = vmatprep.subr.mxu0 0.0
      %267 = vmatpush1.msra.mxu0 0.0
      %268 = vmatprep.subr.mxu0 0.0
      %269 = vmatpush1.msra.mxu0 0.0
      %270 = vmatprep.subr.mxu0 0.0
      %271 = vmatpush1.msra.mxu0 0.0
      %272 = vmatprep.subr.mxu0 0.0
      %273 = vmatpush1.msra.mxu0 0.0
      %274 = vmatprep.subr.mxu0 0.0
      %275 = vmatpush1.msra.mxu0 0.0
      %276 = vmatprep.subr.mxu0 0.0
      %277 = vmatpush1.msra.mxu0 0.0
      %278 = vmatprep.subr.mxu0 0.0
      %279 = vmatpush1.msra.mxu0 0.0
      %280 = vmatprep.subr.mxu0 0.0
      %281 = vmatpush1.msra.mxu0 0.0
      %282 = vmatprep.subr.mxu0 0.0
      %283 = vmatpush1.msra.mxu0 0.0
      %284 = vmatprep.subr.mxu0 0.0
      %285 = vmatpush1.msra.mxu0 0.0
      %286 = vmatprep.subr.mxu0 0.0
      %287 = vmatpush1.msra.mxu0 0.0
      %288 = vmatprep.subr.mxu0 0.0
      %289 = vmatpush1.msra.mxu0 0.0
      %290 = vmatprep.subr.mxu0 0.0
      %291 = vmatpush1.msra.mxu0 0.0
      %292 = vmatprep.subr.mxu0 0.0
      %293 = vmatpush1.msra.mxu0 0.0
      %294 = vmatprep.subr.mxu0 0.0
      %295 = vmatpush1.msra.mxu0 0.0
      %296 = vmatprep.subr.mxu0 0.0
      %297 = vmatpush1.msra.mxu0 0.0
      %298 = vmatprep.subr.mxu0 0.0
      %299 = vmatpush1.msra.mxu0 0.0
      %300 = vmatprep.subr.mxu0 0.0
      %301 = vmatpush1.msra.mxu0 0.0
      %302 = vmatprep.subr.mxu0 0.0
      %303 = vmatpush1.msra.mxu0 0.0
      %304 = vmatprep.subr.mxu0 0.0
      %305 = vmatpush1.msra.mxu0 0.0
      %306 = vmatprep.subr.mxu0 0.0
      %307 = vmatpush1.msra.mxu0 0.0
      %308 = vmatprep.subr.mxu0 0.0
      %309 = vmatpush1.msra.mxu0 0.0
      %310 = vmatprep.subr.mxu0 0.0
      %311 = vmatpush1.msra.mxu0 0.0
      %312 = vmatprep.subr.mxu0 0.0
      %313 = vmatpush1.msra.mxu0 0.0
      %314 = vmatprep.subr.mxu0 0.0
      %315 = vmatpush1.msra.mxu0 0.0
      %316 = vmatprep.subr.mxu0 0.0
      %317 = vmatpush1.msra.mxu0 0.0
      %318 = vmatprep.subr.mxu0 0.0
      %319 = vmatpush1.msra.mxu0 0.0
      %320 = vmatprep.mubr.f32.mxu0 0.0
      %321 = vmatmul.mubr.f32.gmra.mrb[0].mxu0 %v252
      %v322 = vpop.f32.mrb[0].mxu0
      %v323 = vadd.f32 %v248, %v322
      %v324 = vpop.f32.mrb[0].mxu0
      %325 = vdwg.mxu0
      %s326 = scalar_lea.vmem %s1, 16
      %v327 = vld [vmem:[%s326] sm:$0xff]
      %328 = vrot.lane.b32.xlu0 %v168, 126
      %v329 = vpop.permute.xlu0 %328
      %v331 = vsel %vm174, %v327, 0
      %v333 = vsel %vm178, %v329, 0
      %335 = vmatprep.subr.mxu0 0.0
      %336 = vmatpush1.msra.mxu0 %v333
      %337 = vmatprep.subr.mxu0 0.0
      %338 = vmatpush1.msra.mxu0 0.0
      %339 = vmatprep.subr.mxu0 0.0
      %340 = vmatpush1.msra.mxu0 0.0
      %341 = vmatprep.subr.mxu0 0.0
      %342 = vmatpush1.msra.mxu0 0.0
      %343 = vmatprep.subr.mxu0 0.0
      %344 = vmatpush1.msra.mxu0 0.0
      %345 = vmatprep.subr.mxu0 0.0
      %346 = vmatpush1.msra.mxu0 0.0
      %347 = vmatprep.subr.mxu0 0.0
      %348 = vmatpush1.msra.mxu0 0.0
      %349 = vmatprep.subr.mxu0 0.0
      %350 = vmatpush1.msra.mxu0 0.0
      %351 = vmatprep.subr.mxu0 0.0
      %352 = vmatpush1.msra.mxu0 0.0
      %353 = vmatprep.subr.mxu0 0.0
      %354 = vmatpush1.msra.mxu0 0.0
      %355 = vmatprep.subr.mxu0 0.0
      %356 = vmatpush1.msra.mxu0 0.0
      %357 = vmatprep.subr.mxu0 0.0
      %358 = vmatpush1.msra.mxu0 0.0
      %359 = vmatprep.subr.mxu0 0.0
      %360 = vmatpush1.msra.mxu0 0.0
      %361 = vmatprep.subr.mxu0 0.0
      %362 = vmatpush1.msra.mxu0 0.0
      %363 = vmatprep.subr.mxu0 0.0
      %364 = vmatpush1.msra.mxu0 0.0
      %365 = vmatprep.subr.mxu0 0.0
      %366 = vmatpush1.msra.mxu0 0.0
      %367 = vmatprep.subr.mxu0 0.0
      %368 = vmatpush1.msra.mxu0 0.0
      %369 = vmatprep.subr.mxu0 0.0
      %370 = vmatpush1.msra.mxu0 0.0
      %371 = vmatprep.subr.mxu0 0.0
      %372 = vmatpush1.msra.mxu0 0.0
      %373 = vmatprep.subr.mxu0 0.0
      %374 = vmatpush1.msra.mxu0 0.0
      %375 = vmatprep.subr.mxu0 0.0
      %376 = vmatpush1.msra.mxu0 0.0
      %377 = vmatprep.subr.mxu0 0.0
      %378 = vmatpush1.msra.mxu0 0.0
      %379 = vmatprep.subr.mxu0 0.0
      %380 = vmatpush1.msra.mxu0 0.0
      %381 = vmatprep.subr.mxu0 0.0
      %382 = vmatpush1.msra.mxu0 0.0
      %383 = vmatprep.subr.mxu0 0.0
      %384 = vmatpush1.msra.mxu0 0.0
      %385 = vmatprep.subr.mxu0 0.0
      %386 = vmatpush1.msra.mxu0 0.0
      %387 = vmatprep.subr.mxu0 0.0
      %388 = vmatpush1.msra.mxu0 0.0
      %389 = vmatprep.subr.mxu0 0.0
      %390 = vmatpush1.msra.mxu0 0.0
      %391 = vmatprep.subr.mxu0 0.0
      %392 = vmatpush1.msra.mxu0 0.0
      %393 = vmatprep.subr.mxu0 0.0
      %394 = vmatpush1.msra.mxu0 0.0
      %395 = vmatprep.subr.mxu0 0.0
      %396 = vmatpush1.msra.mxu0 0.0
      %397 = vmatprep.subr.mxu0 0.0
      %398 = vmatpush1.msra.mxu0 0.0
      %399 = vmatprep.mubr.f32.mxu0 0.0
      %400 = vmatmul.mubr.f32.gmra.mrb[0].mxu0 %v331
      %v401 = vpop.f32.mrb[0].mxu0
      %v402 = vadd.f32 0.0, %v401
      %v403 = vpop.f32.mrb[0].mxu0
      %404 = vdwg.mxu0
      %v405 = vadd.f32 %v323, %v402
      %s406 = scalar_lea.vmem %s1, 24
      %v407 = vld [vmem:[%s406] sm:$0xff]
      %408 = vrot.lane.b32.xlu0 %v168, 125
      %v409 = vpop.permute.xlu0 %408
      %v411 = vsel %vm174, %v407, 0
      %v413 = vsel %vm178, %v409, 0
      %415 = vmatprep.subr.mxu0 0.0
      %416 = vmatpush1.msra.mxu0 %v413
      %417 = vmatprep.subr.mxu0 0.0
      %418 = vmatpush1.msra.mxu0 0.0
      %419 = vmatprep.subr.mxu0 0.0
      %420 = vmatpush1.msra.mxu0 0.0
      %421 = vmatprep.subr.mxu0 0.0
      %422 = vmatpush1.msra.mxu0 0.0
      %423 = vmatprep.subr.mxu0 0.0
      %424 = vmatpush1.msra.mxu0 0.0
      %425 = vmatprep.subr.mxu0 0.0
      %426 = vmatpush1.msra.mxu0 0.0
      %427 = vmatprep.subr.mxu0 0.0
      %428 = vmatpush1.msra.mxu0 0.0
      %429 = vmatprep.subr.mxu0 0.0
      %430 = vmatpush1.msra.mxu0 0.0
      %431 = vmatprep.subr.mxu0 0.0
      %432 = vmatpush1.msra.mxu0 0.0
      %433 = vmatprep.subr.mxu0 0.0
      %434 = vmatpush1.msra.mxu0 0.0
      %435 = vmatprep.subr.mxu0 0.0
      %436 = vmatpush1.msra.mxu0 0.0
      %437 = vmatprep.subr.mxu0 0.0
      %438 = vmatpush1.msra.mxu0 0.0
      %439 = vmatprep.subr.mxu0 0.0
      %440 = vmatpush1.msra.mxu0 0.0
      %441 = vmatprep.subr.mxu0 0.0
      %442 = vmatpush1.msra.mxu0 0.0
      %443 = vmatprep.subr.mxu0 0.0
      %444 = vmatpush1.msra.mxu0 0.0
      %445 = vmatprep.subr.mxu0 0.0
      %446 = vmatpush1.msra.mxu0 0.0
      %447 = vmatprep.subr.mxu0 0.0
      %448 = vmatpush1.msra.mxu0 0.0
      %449 = vmatprep.subr.mxu0 0.0
      %450 = vmatpush1.msra.mxu0 0.0
      %451 = vmatprep.subr.mxu0 0.0
      %452 = vmatpush1.msra.mxu0 0.0
      %453 = vmatprep.subr.mxu0 0.0
      %454 = vmatpush1.msra.mxu0 0.0
      %455 = vmatprep.subr.mxu0 0.0
      %456 = vmatpush1.msra.mxu0 0.0
      %457 = vmatprep.subr.mxu0 0.0
      %458 = vmatpush1.msra.mxu0 0.0
      %459 = vmatprep.subr.mxu0 0.0
      %460 = vmatpush1.msra.mxu0 0.0
      %461 = vmatprep.subr.mxu0 0.0
      %462 = vmatpush1.msra.mxu0 0.0
      %463 = vmatprep.subr.mxu0 0.0
      %464 = vmatpush1.msra.mxu0 0.0
      %465 = vmatprep.subr.mxu0 0.0
      %466 = vmatpush1.msra.mxu0 0.0
      %467 = vmatprep.subr.mxu0 0.0
      %468 = vmatpush1.msra.mxu0 0.0
      %469 = vmatprep.subr.mxu0 0.0
      %470 = vmatpush1.msra.mxu0 0.0
      %471 = vmatprep.subr.mxu0 0.0
      %472 = vmatpush1.msra.mxu0 0.0
      %473 = vmatprep.subr.mxu0 0.0
      %474 = vmatpush1.msra.mxu0 0.0
      %475 = vmatprep.subr.mxu0 0.0
      %476 = vmatpush1.msra.mxu0 0.0
      %477 = vmatprep.subr.mxu0 0.0
      %478 = vmatpush1.msra.mxu0 0.0
      %479 = vmatprep.mubr.f32.mxu0 0.0
      %480 = vmatmul.mubr.f32.gmra.mrb[0].mxu0 %v411
      %v481 = vpop.f32.mrb[0].mxu0
      %v482 = vadd.f32 0.0, %v481
      %v483 = vpop.f32.mrb[0].mxu0
      %484 = vdwg.mxu0
      %v485 = vadd.f32 %v405, %v482
      %s486 = scalar_lea.vmem %s1, 32
      %v487 = vld [vmem:[%s486] sm:$0xff]
      %488 = vrot.lane.b32.xlu0 %v168, 124
      %v489 = vpop.permute.xlu0 %488
      %v491 = vsel %vm174, %v487, 0
      %v493 = vsel %vm178, %v489, 0
      %495 = vmatprep.subr.mxu0 0.0
      %496 = vmatpush1.msra.mxu0 %v493
      %497 = vmatprep.subr.mxu0 0.0
      %498 = vmatpush1.msra.mxu0 0.0
      %499 = vmatprep.subr.mxu0 0.0
      %500 = vmatpush1.msra.mxu0 0.0
      %501 = vmatprep.subr.mxu0 0.0
      %502 = vmatpush1.msra.mxu0 0.0
      %503 = vmatprep.subr.mxu0 0.0
      %504 = vmatpush1.msra.mxu0 0.0
      %505 = vmatprep.subr.mxu0 0.0
      %506 = vmatpush1.msra.mxu0 0.0
      %507 = vmatprep.subr.mxu0 0.0
      %508 = vmatpush1.msra.mxu0 0.0
      %509 = vmatprep.subr.mxu0 0.0
      %510 = vmatpush1.msra.mxu0 0.0
      %511 = vmatprep.subr.mxu0 0.0
      %512 = vmatpush1.msra.mxu0 0.0
      %513 = vmatprep.subr.mxu0 0.0
      %514 = vmatpush1.msra.mxu0 0.0
      %515 = vmatprep.subr.mxu0 0.0
      %516 = vmatpush1.msra.mxu0 0.0
      %517 = vmatprep.subr.mxu0 0.0
      %518 = vmatpush1.msra.mxu0 0.0
      %519 = vmatprep.subr.mxu0 0.0
      %520 = vmatpush1.msra.mxu0 0.0
      %521 = vmatprep.subr.mxu0 0.0
      %522 = vmatpush1.msra.mxu0 0.0
      %523 = vmatprep.subr.mxu0 0.0
      %524 = vmatpush1.msra.mxu0 0.0
      %525 = vmatprep.subr.mxu0 0.0
      %526 = vmatpush1.msra.mxu0 0.0
      %527 = vmatprep.subr.mxu0 0.0
      %528 = vmatpush1.msra.mxu0 0.0
      %529 = vmatprep.subr.mxu0 0.0
      %530 = vmatpush1.msra.mxu0 0.0
      %531 = vmatprep.subr.mxu0 0.0
      %532 = vmatpush1.msra.mxu0 0.0
      %533 = vmatprep.subr.mxu0 0.0
      %534 = vmatpush1.msra.mxu0 0.0
      %535 = vmatprep.subr.mxu0 0.0
      %536 = vmatpush1.msra.mxu0 0.0
      %537 = vmatprep.subr.mxu0 0.0
      %538 = vmatpush1.msra.mxu0 0.0
      %539 = vmatprep.subr.mxu0 0.0
      %540 = vmatpush1.msra.mxu0 0.0
      %541 = vmatprep.subr.mxu0 0.0
      %542 = vmatpush1.msra.mxu0 0.0
      %543 = vmatprep.subr.mxu0 0.0
      %544 = vmatpush1.msra.mxu0 0.0
      %545 = vmatprep.subr.mxu0 0.0
      %546 = vmatpush1.msra.mxu0 0.0
      %547 = vmatprep.subr.mxu0 0.0
      %548 = vmatpush1.msra.mxu0 0.0
      %549 = vmatprep.subr.mxu0 0.0
      %550 = vmatpush1.msra.mxu0 0.0
      %551 = vmatprep.subr.mxu0 0.0
      %552 = vmatpush1.msra.mxu0 0.0
      %553 = vmatprep.subr.mxu0 0.0
      %554 = vmatpush1.msra.mxu0 0.0
      %555 = vmatprep.subr.mxu0 0.0
      %556 = vmatpush1.msra.mxu0 0.0
      %557 = vmatprep.subr.mxu0 0.0
      %558 = vmatpush1.msra.mxu0 0.0
      %559 = vmatprep.mubr.f32.mxu0 0.0
      %560 = vmatmul.mubr.f32.gmra.mrb[0].mxu0 %v491
      %v561 = vpop.f32.mrb[0].mxu0
      %v562 = vadd.f32 0.0, %v561
      %v563 = vpop.f32.mrb[0].mxu0
      %564 = vdwg.mxu0
      %v565 = vadd.f32 %v485, %v562
      %567 = vset.pattern.permute.xlu0 0
      %568 = vperm.xlu0 %567, %v166
      %v569 = vpop.permute.xlu0 %568
      %v571 = vadd.f32 %v565, %v569
      %v572 = vmax.f32 %v571, 0.0
      %vm573 = vcmask 130048
      %574 = vst.msk [vmem:[%s165] sm:$0xff] %vm573, %v572
      %p575 = scmp.lt.s32.totalorder %s14, 1
      %s576 = scalar_select %p575, %s14, 1
      %s577 = smul.addr %s576, 8
      %s578 = scalar_lea.vmem %s3, %s577
      // Predicated region
      $region33: #{conv_or_deconv_block.2} parent=31 // pred_check
        %p579 = pneg %p100
      $region34: #{conv_or_deconv_block.2} parent=31 // pred_check_branch
        %581 = sbr.rel (%p579) target = $region36
      $region35: #{conv_or_deconv_block.2} parent=31 // pred_region
        _
      $region36: #{conv_or_deconv_block.2} parent=31 // pred_fallthru
        _
    $region32: #{conv_or_deconv_block.2} parent=5 // pred_fallthru
      _
    %p582 = scmp.le.s32.totalorder 2, %s9
    // Predicated region
    $region37: #{conv_or_deconv_block.2} parent=5 // pred_check
      %p583 = pneg %p582
    $region38: #{conv_or_deconv_block.2} parent=5 // pred_check_branch
      %585 = sbr.rel (%p583) target = $region40
    $region39: #{conv_or_deconv_block.2} parent=5 // pred_region
      %s586 = ssub.s32 %s9, 2
      // Predicated region
      $region41: #{conv_or_deconv_block.2} parent=39 // pred_check
        %p587 = pneg %p106
      $region42: #{conv_or_deconv_block.2} parent=39 // pred_check_branch
        %589 = sbr.rel (%p587) target = $region44
      $region43: #{conv_or_deconv_block.2} parent=39 // pred_region
        %p590 = scmp.lt.s32.totalorder %s15, 1
        %s591 = scalar_select %p590, %s15, 1
        %s592 = smul.addr %s591, 8
        %s593 = scalar_lea.vmem %s3, %s592
      $region44: #{conv_or_deconv_block.2} parent=39 // pred_fallthru
        _
    $region40: #{conv_or_deconv_block.2} parent=5 // pred_fallthru
      _
  $region6: #{conv_or_deconv_block.2} parent=0 // loop_footer
    %s13 = sadd.s32 1, %s9
  $region7: #{conv_or_deconv_block.2} parent=0 // loop_footer_branch
    %8 = sbr.rel target = $region3
  $region8: #{conv_or_deconv_block.2} parent=0 // loop_exit
    _

// kernel: conv_or_deconv_block.3
$region0: #{conv_or_deconv_block.3}
  #allocation0 [shape = 'u32[]', space=smem, size = 0x4, offset = 0x4, fixed_abs, tag = 'smem constant byte address 0x4 - core index']
  #allocation1 [shape = 'u32[144,128]{1,0:T(1,128)}', space=vmem, size = 0x12000, scoped, tag = 'internal scratch']
  %s0 = inlined_call_operand.vmem [shape: f32[2,2,8,9], index: 0, kind: input, shape index: {}]
  %s1 = inlined_call_operand.vmem [shape: f32[3,16,8], index: 1, kind: input, shape index: {}]
  %s2 = inlined_call_operand.vmem [shape: f32[16,1], index: 2, kind: input, shape index: {}]
  %s3 = inlined_call_operand.vmem [shape: f32[2,1,16,8], index: 3, kind: output, shape index: {}]
  %s4 = sld [smem:[#allocation0]]
  $region45: #{conv_or_deconv_block.3} parent=0
    _
  %s6 = ssub.s32 1, %s4
  %s7 = scalar_select 0, %s6, %s4
  loop: start=0, step=1, limit=4
  $region2: #{conv_or_deconv_block.3} parent=0 // loop_pre_header
    _
  $region3: #{conv_or_deconv_block.3} parent=0 // loop_header
    %s9 = sphi 0, %s13
    %p10 = scmp.ge.s32.totalorder %s9, 4
    %s19 = sphi 0, %s21
    %s22 = sphi 0, %s19
    %s23 = sphi 0, %s22
    %s39 = sphi 0, %s23
    %s43 = sphi 0, %s43
    %s45 = sphi 0, %s43
    %s46 = sphi 0, %s45
    %s60 = sphi 0, %s46
    %s64 = sphi 0, %s64
    %s66 = sphi 0, %s64
    %s67 = sphi 0, %s66
    %s81 = sphi 0, %s67
    %s87 = sphi 0, %s89
    %s90 = sphi 0, %s87
    %s91 = sphi 0, %s90
    %s107 = sphi 0, %s91
  $region4: #{conv_or_deconv_block.3} parent=0 // loop_header_branch
    %12 = sbr.rel (%p10) target = $region8
  $region5: #{conv_or_deconv_block.3} parent=0 // loop_body
    %s14 = ssub.s32 %s9, 1
    %s15 = ssub.s32 %s9, 2
    %s16 = sadd.s32 %s9, 1
    %s17 = ssub.s32 %s9, %s16
    %p18 = scmp.eq.s32.totalorder %s17, 0
    %s20 = sadd.s32 %s19, 1
    %s21 = scalar_select %p18, %s19, %s20
    %p24 = pneg %p18
    %p25 = scmp.eq.s32.totalorder %s9, 1
    %p26 = por %p24, %p25
    %p27 = scmp.ne.s32.totalorder %s19, %s22
    %p28 = scmp.eq.s32.totalorder %s9, 0
    %p29 = por %p27, %p28
    %p30 = scmp.ne.s32.totalorder %s19, %s22
    %p31 = scmp.eq.s32.totalorder %s14, 1
    %p32 = por %p30, %p31
    %p33 = scmp.ne.s32.totalorder %s22, %s23
    %p34 = scmp.eq.s32.totalorder %s14, 0
    %p35 = por %p33, %p34
    %p36 = scmp.ne.s32.totalorder %s22, %s23
    %p37 = scmp.eq.s32.totalorder %s15, 1
    %p38 = por %p36, %p37
    %p40 = scmp.ne.s32.totalorder %s23, %s39
    %p41 = scmp.eq.s32.totalorder %s15, 0
    %p42 = por %p40, %p41
    %s44 = sadd.s32 %s43, 1
    %p47 = scmp.eq.s32.totalorder %s9, 1
    %p48 = scmp.ne.s32.totalorder %s43, %s45
    %p49 = scmp.eq.s32.totalorder %s9, 0
    %p50 = por %p48, %p49
    %p51 = scmp.ne.s32.totalorder %s43, %s45
    %p52 = scmp.eq.s32.totalorder %s14, 1
    %p53 = por %p51, %p52
    %p54 = scmp.ne.s32.totalorder %s45, %s46
    %p55 = scmp.eq.s32.totalorder %s14, 0
    %p56 = por %p54, %p55
    %p57 = scmp.ne.s32.totalorder %s45, %s46
    %p58 = scmp.eq.s32.totalorder %s15, 1
    %p59 = por %p57, %p58
    %p61 = scmp.ne.s32.totalorder %s46, %s60
    %p62 = scmp.eq.s32.totalorder %s15, 0
    %p63 = por %p61, %p62
    %s65 = sadd.s32 %s64, 1
    %p68 = scmp.eq.s32.totalorder %s9, 1
    %p69 = scmp.ne.s32.totalorder %s64, %s66
    %p70 = scmp.eq.s32.totalorder %s9, 0
    %p71 = por %p69, %p70
    %p72 = scmp.ne.s32.totalorder %s64, %s66
    %p73 = scmp.eq.s32.totalorder %s14, 1
    %p74 = por %p72, %p73
    %p75 = scmp.ne.s32.totalorder %s66, %s67
    %p76 = scmp.eq.s32.totalorder %s14, 0
    %p77 = por %p75, %p76
    %p78 = scmp.ne.s32.totalorder %s66, %s67
    %p79 = scmp.eq.s32.totalorder %s15, 1
    %p80 = por %p78, %p79
    %p82 = scmp.ne.s32.totalorder %s67, %s81
    %p83 = scmp.eq.s32.totalorder %s15, 0
    %p84 = por %p82, %p83
    %s85 = ssub.s32 %s9, %s16
    %p86 = scmp.eq.s32.totalorder %s85, 0
    %s88 = sadd.s32 %s87, 1
    %s89 = scalar_select %p86, %s87, %s88
    %p92 = pneg %p86
    %p93 = scmp.eq.s32.totalorder %s9, 1
    %p94 = por %p92, %p93
    %p95 = scmp.ne.s32.totalorder %s87, %s90
    %p96 = scmp.eq.s32.totalorder %s9, 0
    %p97 = por %p95, %p96
    %p98 = scmp.ne.s32.totalorder %s87, %s90
    %p99 = scmp.eq.s32.totalorder %s14, 1
    %p100 = por %p98, %p99
    %p101 = scmp.ne.s32.totalorder %s90, %s91
    %p102 = scmp.eq.s32.totalorder %s14, 0
    %p103 = por %p101, %p102
    %p104 = scmp.ne.s32.totalorder %s90, %s91
    %p105 = scmp.eq.s32.totalorder %s15, 1
    %p106 = por %p104, %p105
    %p108 = scmp.ne.s32.totalorder %s91, %s107
    %p109 = scmp.eq.s32.totalorder %s15, 0
    %p110 = por %p108, %p109
    %p111 = scmp.le.s32.totalorder 1, %s9
    %p112 = scmp.lt.s32.totalorder %s9, 3
    %p113 = pnand %p111, %p112
    %p114 = pneg %p113
    // Predicated region
    $region9: #{conv_or_deconv_block.3} parent=5 // pred_check
      _
    $region10: #{conv_or_deconv_block.3} parent=5 // pred_check_branch
      %116 = sbr.rel (%p113) target = $region12
    $region11: #{conv_or_deconv_block.3} parent=5 // pred_region
      %s117 = ssub.s32 %s9, 1
      // Predicated region
      $region13: #{conv_or_deconv_block.3} parent=11 // pred_check
        %p118 = pneg %p56
      $region14: #{conv_or_deconv_block.3} parent=11 // pred_check_branch
        %120 = sbr.rel (%p118) target = $region16
      $region15: #{conv_or_deconv_block.3} parent=11 // pred_region
        _
      $region16: #{conv_or_deconv_block.3} parent=11 // pred_fallthru
        _
      // Predicated region
      $region17: #{conv_or_deconv_block.3} parent=11 // pred_check
        %p121 = pneg %p77
      $region18: #{conv_or_deconv_block.3} parent=11 // pred_check_branch
        %123 = sbr.rel (%p121) target = $region20
      $region19: #{conv_or_deconv_block.3} parent=11 // pred_region
        _
      $region20: #{conv_or_deconv_block.3} parent=11 // pred_fallthru
        _
    $region12: #{conv_or_deconv_block.3} parent=5 // pred_fallthru
      _
    %p124 = scmp.lt.s32.totalorder %s9, 2
    // Predicated region
    $region21: #{conv_or_deconv_block.3} parent=5 // pred_check
      %p125 = pneg %p124
    $region22: #{conv_or_deconv_block.3} parent=5 // pred_check_branch
      %127 = sbr.rel (%p125) target = $region24
    $region23: #{conv_or_deconv_block.3} parent=5 // pred_region
      // Predicated region
      $region25: #{conv_or_deconv_block.3} parent=23 // pred_check
        %p128 = pneg %p29
      $region26: #{conv_or_deconv_block.3} parent=23 // pred_check_branch
        %130 = sbr.rel (%p128) target = $region28
      $region27: #{conv_or_deconv_block.3} parent=23 // pred_region
        %p131 = scmp.lt.s32.totalorder %s9, 1
        %s132 = scalar_select %p131, %s9, 1
        %s133 = smul.addr %s132, 2
        %s134 = smul.addr %s133, 8
        %s135 = scalar_lea.vmem %s0, %s134
      $region28: #{conv_or_deconv_block.3} parent=23 // pred_fallthru
        _
    $region24: #{conv_or_deconv_block.3} parent=5 // pred_fallthru
      _
    %p136 = scmp.le.s32.totalorder 1, %s9
    %p137 = scmp.lt.s32.totalorder %s9, 3
    %p138 = pnand %p136, %p137
    %p139 = pneg %p138
    // Predicated region
    $region29: #{conv_or_deconv_block.3} parent=5 // pred_check
      _
    $region30: #{conv_or_deconv_block.3} parent=5 // pred_check_branch
      %141 = sbr.rel (%p138) target = $region32
    $region31: #{conv_or_deconv_block.3} parent=5 // pred_region
      %s142 = ssub.s32 %s9, 1
      %p143 = scmp.lt.s32.totalorder %s14, 1
      %s144 = scalar_select %p143, %s14, 1
      %s145 = smul.addr %s144, 2
      %s146 = smul.addr %s145, 8
      %s147 = scalar_lea.vmem %s0, %s146
      %p148 = pneg %p35
      %p149 = pneg %p32
      %p150 = pneg %p56
      %p151 = pneg %p53
      %p152 = pneg %p77
      %p153 = pneg %p74
      %p154 = pneg %p103
      %p155 = pneg %p100
      %p156 = scmp.lt.s32.totalorder %s14, 1
      %s157 = scalar_select %p156, %s14, 1
      %s158 = smul.addr %s157, 2
      %s159 = smul.addr %s158, 8
      %s160 = scalar_lea.vmem %s3, %s159
      %p161 = scmp.lt.s32.totalorder %s14, 1
      %s162 = scalar_select %p161, %s14, 1
      %s163 = smul.addr %s162, 2
      %s164 = smul.addr %s163, 8
      %s165 = scalar_lea.vmem %s0, %s164
      %p166 = scmp.lt.s32.totalorder %s14, 1
      %s167 = scalar_select %p166, %s14, 1
      %s168 = smul.addr %s167, 2
      %s169 = smul.addr %s168, 8
      %s170 = scalar_lea.vmem %s3, %s169
      %v171 = vld [vmem:[%s2] sm:$0xff]
      %v172 = vld [vmem:[%s2 + $0x8] sm:$0xff]
      %v173 = vld [vmem:[%s1] sm:$0xff]
      %v174 = vld [vmem:[%s1 + $0x8] sm:$0xff]
      %v175 = vld [vmem:[%s165] sm:$0xff]
      %s176 = scalar_lea.vmem %s1, 16
      %v177 = vld [vmem:[%s176] sm:$0xff]
      %v178 = vld [vmem:[%s176 + $0x8] sm:$0xff]
      %s179 = scalar_lea.vmem %s165, 8
      %v180 = vld [vmem:[%s179] sm:$0xff]
      %vm181 = vcmask 64512
      %v183 = vsel %vm181, %v177, 0
      %v186 = vsel %vm181, %v178, 0
      %188 = vmatprep.subr.mxu0 0.0
      %189 = vmatpush1.msra.mxu0 %v180
      %190 = vmatprep.subr.mxu0 0.0
      %191 = vmatpush1.msra.mxu0 0.0
      %192 = vmatprep.subr.mxu0 0.0
      %193 = vmatpush1.msra.mxu0 0.0
      %194 = vmatprep.subr.mxu0 0.0
      %195 = vmatpush1.msra.mxu0 0.0
      %196 = vmatprep.subr.mxu0 0.0
      %197 = vmatpush1.msra.mxu0 0.0
      %198 = vmatprep.subr.mxu0 0.0
      %199 = vmatpush1.msra.mxu0 0.0
      %200 = vmatprep.subr.mxu0 0.0
      %201 = vmatpush1.msra.mxu0 0.0
      %202 = vmatprep.subr.mxu0 0.0
      %203 = vmatpush1.msra.mxu0 0.0
      %204 = vmatprep.subr.mxu0 0.0
      %205 = vmatpush1.msra.mxu0 0.0
      %206 = vmatprep.subr.mxu0 0.0
      %207 = vmatpush1.msra.mxu0 0.0
      %208 = vmatprep.subr.mxu0 0.0
      %209 = vmatpush1.msra.mxu0 0.0
      %210 = vmatprep.subr.mxu0 0.0
      %211 = vmatpush1.msra.mxu0 0.0
      %212 = vmatprep.subr.mxu0 0.0
      %213 = vmatpush1.msra.mxu0 0.0
      %214 = vmatprep.subr.mxu0 0.0
      %215 = vmatpush1.msra.mxu0 0.0
      %216 = vmatprep.subr.mxu0 0.0
      %217 = vmatpush1.msra.mxu0 0.0
      %218 = vmatprep.subr.mxu0 0.0
      %219 = vmatpush1.msra.mxu0 0.0
      %220 = vmatprep.subr.mxu0 0.0
      %221 = vmatpush1.msra.mxu0 0.0
      %222 = vmatprep.subr.mxu0 0.0
      %223 = vmatpush1.msra.mxu0 0.0
      %224 = vmatprep.subr.mxu0 0.0
      %225 = vmatpush1.msra.mxu0 0.0
      %226 = vmatprep.subr.mxu0 0.0
      %227 = vmatpush1.msra.mxu0 0.0
      %228 = vmatprep.subr.mxu0 0.0
      %229 = vmatpush1.msra.mxu0 0.0
      %230 = vmatprep.subr.mxu0 0.0
      %231 = vmatpush1.msra.mxu0 0.0
      %232 = vmatprep.subr.mxu0 0.0
      %233 = vmatpush1.msra.mxu0 0.0
      %234 = vmatprep.subr.mxu0 0.0
      %235 = vmatpush1.msra.mxu0 0.0
      %236 = vmatprep.subr.mxu0 0.0
      %237 = vmatpush1.msra.mxu0 0.0
      %238 = vmatprep.subr.mxu0 0.0
      %239 = vmatpush1.msra.mxu0 0.0
      %240 = vmatprep.subr.mxu0 0.0
      %241 = vmatpush1.msra.mxu0 0.0
      %242 = vmatprep.subr.mxu0 0.0
      %243 = vmatpush1.msra.mxu0 0.0
      %244 = vmatprep.subr.mxu0 0.0
      %245 = vmatpush1.msra.mxu0 0.0
      %246 = vmatprep.subr.mxu0 0.0
      %247 = vmatpush1.msra.mxu0 0.0
      %248 = vmatprep.subr.mxu0 0.0
      %249 = vmatpush1.msra.mxu0 0.0
      %250 = vmatprep.subr.mxu0 0.0
      %251 = vmatpush1.msra.mxu0 0.0
      %252 = vmatprep.mubr.f32.mxu0 0.0
      %253 = vmatmul.mubr.f32.gmra.mrb[0].mxu0 %v183
      %v254 = vpop.f32.mrb[0].mxu0
      %v255 = vadd.f32 0.0, %v254
      %v256 = vpop.f32.mrb[0].mxu0
      %257 = vmatprep.mubr.f32.mxu0 0.0
      %258 = vmatmul.mubr.f32.gmra.mrb[0].mxu0 %v186
      %v259 = vpop.f32.mrb[0].mxu0
      %v260 = vadd.f32 0.0, %v259
      %v261 = vpop.f32.mrb[0].mxu0
      %262 = vdwg.mxu0
      %v264 = vsel %vm181, %v173, 0
      %v267 = vsel %vm181, %v174, 0
      %269 = vmatprep.subr.mxu0 0.0
      %270 = vmatpush1.msra.mxu0 %v175
      %271 = vmatprep.subr.mxu0 0.0
      %272 = vmatpush1.msra.mxu0 0.0
      %273 = vmatprep.subr.mxu0 0.0
      %274 = vmatpush1.msra.mxu0 0.0
      %275 = vmatprep.subr.mxu0 0.0
      %276 = vmatpush1.msra.mxu0 0.0
      %277 = vmatprep.subr.mxu0 0.0
      %278 = vmatpush1.msra.mxu0 0.0
      %279 = vmatprep.subr.mxu0 0.0
      %280 = vmatpush1.msra.mxu0 0.0
      %281 = vmatprep.subr.mxu0 0.0
      %282 = vmatpush1.msra.mxu0 0.0
      %283 = vmatprep.subr.mxu0 0.0
      %284 = vmatpush1.msra.mxu0 0.0
      %285 = vmatprep.subr.mxu0 0.0
      %286 = vmatpush1.msra.mxu0 0.0
      %287 = vmatprep.subr.mxu0 0.0
      %288 = vmatpush1.msra.mxu0 0.0
      %289 = vmatprep.subr.mxu0 0.0
      %290 = vmatpush1.msra.mxu0 0.0
      %291 = vmatprep.subr.mxu0 0.0
      %292 = vmatpush1.msra.mxu0 0.0
      %293 = vmatprep.subr.mxu0 0.0
      %294 = vmatpush1.msra.mxu0 0.0
      %295 = vmatprep.subr.mxu0 0.0
      %296 = vmatpush1.msra.mxu0 0.0
      %297 = vmatprep.subr.mxu0 0.0
      %298 = vmatpush1.msra.mxu0 0.0
      %299 = vmatprep.subr.mxu0 0.0
      %300 = vmatpush1.msra.mxu0 0.0
      %301 = vmatprep.subr.mxu0 0.0
      %302 = vmatpush1.msra.mxu0 0.0
      %303 = vmatprep.subr.mxu0 0.0
      %304 = vmatpush1.msra.mxu0 0.0
      %305 = vmatprep.subr.mxu0 0.0
      %306 = vmatpush1.msra.mxu0 0.0
      %307 = vmatprep.subr.mxu0 0.0
      %308 = vmatpush1.msra.mxu0 0.0
      %309 = vmatprep.subr.mxu0 0.0
      %310 = vmatpush1.msra.mxu0 0.0
      %311 = vmatprep.subr.mxu0 0.0
      %312 = vmatpush1.msra.mxu0 0.0
      %313 = vmatprep.subr.mxu0 0.0
      %314 = vmatpush1.msra.mxu0 0.0
      %315 = vmatprep.subr.mxu0 0.0
      %316 = vmatpush1.msra.mxu0 0.0
      %317 = vmatprep.subr.mxu0 0.0
      %318 = vmatpush1.msra.mxu0 0.0
      %319 = vmatprep.subr.mxu0 0.0
      %320 = vmatpush1.msra.mxu0 0.0
      %321 = vmatprep.subr.mxu0 0.0
      %322 = vmatpush1.msra.mxu0 0.0
      %323 = vmatprep.subr.mxu0 0.0
      %324 = vmatpush1.msra.mxu0 0.0
      %325 = vmatprep.subr.mxu0 0.0
      %326 = vmatpush1.msra.mxu0 0.0
      %327 = vmatprep.subr.mxu0 0.0
      %328 = vmatpush1.msra.mxu0 0.0
      %329 = vmatprep.subr.mxu0 0.0
      %330 = vmatpush1.msra.mxu0 0.0
      %331 = vmatprep.subr.mxu0 0.0
      %332 = vmatpush1.msra.mxu0 0.0
      %333 = vmatprep.mubr.f32.mxu0 0.0
      %334 = vmatmul.mubr.f32.gmra.mrb[0].mxu0 %v264
      %v335 = vpop.f32.mrb[0].mxu0
      %v336 = vadd.f32 %v255, %v335
      %v337 = vpop.f32.mrb[0].mxu0
      %338 = vmatprep.mubr.f32.mxu0 0.0
      %339 = vmatmul.mubr.f32.gmra.mrb[0].mxu0 %v267
      %v340 = vpop.f32.mrb[0].mxu0
      %v341 = vadd.f32 %v260, %v340
      %v342 = vpop.f32.mrb[0].mxu0
      %343 = vdwg.mxu0
      %s344 = scalar_lea.vmem %s1, 32
      %v345 = vld [vmem:[%s344] sm:$0xff]
      %v346 = vld [vmem:[%s344 + $0x8] sm:$0xff]
      %348 = vrot.lane.b32.xlu0 %v175, 127
      %v349 = vpop.permute.xlu0 %348
      %v352 = vsel %vm181, %v345, 0
      %v355 = vsel %vm181, %v346, 0
      %357 = vmatprep.subr.mxu0 0.0
      %358 = vmatpush1.msra.mxu0 %v349
      %359 = vmatprep.subr.mxu0 0.0
      %360 = vmatpush1.msra.mxu0 0.0
      %361 = vmatprep.subr.mxu0 0.0
      %362 = vmatpush1.msra.mxu0 0.0
      %363 = vmatprep.subr.mxu0 0.0
      %364 = vmatpush1.msra.mxu0 0.0
      %365 = vmatprep.subr.mxu0 0.0
      %366 = vmatpush1.msra.mxu0 0.0
      %367 = vmatprep.subr.mxu0 0.0
      %368 = vmatpush1.msra.mxu0 0.0
      %369 = vmatprep.subr.mxu0 0.0
      %370 = vmatpush1.msra.mxu0 0.0
      %371 = vmatprep.subr.mxu0 0.0
      %372 = vmatpush1.msra.mxu0 0.0
      %373 = vmatprep.subr.mxu0 0.0
      %374 = vmatpush1.msra.mxu0 0.0
      %375 = vmatprep.subr.mxu0 0.0
      %376 = vmatpush1.msra.mxu0 0.0
      %377 = vmatprep.subr.mxu0 0.0
      %378 = vmatpush1.msra.mxu0 0.0
      %379 = vmatprep.subr.mxu0 0.0
      %380 = vmatpush1.msra.mxu0 0.0
      %381 = vmatprep.subr.mxu0 0.0
      %382 = vmatpush1.msra.mxu0 0.0
      %383 = vmatprep.subr.mxu0 0.0
      %384 = vmatpush1.msra.mxu0 0.0
      %385 = vmatprep.subr.mxu0 0.0
      %386 = vmatpush1.msra.mxu0 0.0
      %387 = vmatprep.subr.mxu0 0.0
      %388 = vmatpush1.msra.mxu0 0.0
      %389 = vmatprep.subr.mxu0 0.0
      %390 = vmatpush1.msra.mxu0 0.0
      %391 = vmatprep.subr.mxu0 0.0
      %392 = vmatpush1.msra.mxu0 0.0
      %393 = vmatprep.subr.mxu0 0.0
      %394 = vmatpush1.msra.mxu0 0.0
      %395 = vmatprep.subr.mxu0 0.0
      %396 = vmatpush1.msra.mxu0 0.0
      %397 = vmatprep.subr.mxu0 0.0
      %398 = vmatpush1.msra.mxu0 0.0
      %399 = vmatprep.subr.mxu0 0.0
      %400 = vmatpush1.msra.mxu0 0.0
      %401 = vmatprep.subr.mxu0 0.0
      %402 = vmatpush1.msra.mxu0 0.0
      %403 = vmatprep.subr.mxu0 0.0
      %404 = vmatpush1.msra.mxu0 0.0
      %405 = vmatprep.subr.mxu0 0.0
      %406 = vmatpush1.msra.mxu0 0.0
      %407 = vmatprep.subr.mxu0 0.0
      %408 = vmatpush1.msra.mxu0 0.0
      %409 = vmatprep.subr.mxu0 0.0
      %410 = vmatpush1.msra.mxu0 0.0
      %411 = vmatprep.subr.mxu0 0.0
      %412 = vmatpush1.msra.mxu0 0.0
      %413 = vmatprep.subr.mxu0 0.0
      %414 = vmatpush1.msra.mxu0 0.0
      %415 = vmatprep.subr.mxu0 0.0
      %416 = vmatpush1.msra.mxu0 0.0
      %417 = vmatprep.subr.mxu0 0.0
      %418 = vmatpush1.msra.mxu0 0.0
      %419 = vmatprep.subr.mxu0 0.0
      %420 = vmatpush1.msra.mxu0 0.0
      %421 = vmatprep.mubr.f32.mxu0 0.0
      %422 = vmatmul.mubr.f32.gmra.mrb[0].mxu0 %v352
      %v423 = vpop.f32.mrb[0].mxu0
      %v424 = vadd.f32 0.0, %v423
      %v425 = vpop.f32.mrb[0].mxu0
      %426 = vmatprep.mubr.f32.mxu0 0.0
      %427 = vmatmul.mubr.f32.gmra.mrb[0].mxu0 %v355
      %v428 = vpop.f32.mrb[0].mxu0
      %v429 = vadd.f32 0.0, %v428
      %v430 = vpop.f32.mrb[0].mxu0
      %431 = vdwg.mxu0
      %v432 = vadd.f32 %v336, %v424
      %v433 = vadd.f32 %v341, %v429
      %435 = vset.pattern.permute.xlu0 0
      %436 = vperm.xlu0 %435, %v171
      %v437 = vpop.permute.xlu0 %436
      %440 = vset.pattern.permute.xlu0 0
      %441 = vperm.xlu0 %440, %v172
      %v442 = vpop.permute.xlu0 %441
      %v444 = vadd.f32 %v432, %v437
      %v445 = vadd.f32 %v433, %v442
      %v446 = vmax.f32 %v444, 0.0
      %v447 = vmax.f32 %v445, 0.0
      %448 = vst.msk [vmem:[%s170] sm:$0xff] %vm181, %v446
      %449 = vst.msk [vmem:[%s170 + $0x8] sm:$0xff] %vm181, %v447
      %p450 = scmp.lt.s32.totalorder %s14, 1
      %s451 = scalar_select %p450, %s14, 1
      %s452 = smul.addr %s451, 2
      %s453 = smul.addr %s452, 8
      %s454 = scalar_lea.vmem %s3, %s453
      // Predicated region
      $region33: #{conv_or_deconv_block.3} parent=31 // pred_check
        %p455 = pneg %p100
      $region34: #{conv_or_deconv_block.3} parent=31 // pred_check_branch
        %457 = sbr.rel (%p455) target = $region36
      $region35: #{conv_or_deconv_block.3} parent=31 // pred_region
        _
      $region36: #{conv_or_deconv_block.3} parent=31 // pred_fallthru
        _
    $region32: #{conv_or_deconv_block.3} parent=5 // pred_fallthru
      _
    %p458 = scmp.le.s32.totalorder 2, %s9
    // Predicated region
    $region37: #{conv_or_deconv_block.3} parent=5 // pred_check
      %p459 = pneg %p458
    $region38: #{conv_or_deconv_block.3} parent=5 // pred_check_branch
      %461 = sbr.rel (%p459) target = $region40
    $region39: #{conv_or_deconv_block.3} parent=5 // pred_region
      %s462 = ssub.s32 %s9, 2
      // Predicated region
      $region41: #{conv_or_deconv_block.3} parent=39 // pred_check
        %p463 = pneg %p106
      $region42: #{conv_or_deconv_block.3} parent=39 // pred_check_branch
        %465 = sbr.rel (%p463) target = $region44
      $region43: #{conv_or_deconv_block.3} parent=39 // pred_region
        %p466 = scmp.lt.s32.totalorder %s15, 1
        %s467 = scalar_select %p466, %s15, 1
        %s468 = smul.addr %s467, 2
        %s469 = smul.addr %s468, 8
        %s470 = scalar_lea.vmem %s3, %s469
      $region44: #{conv_or_deconv_block.3} parent=39 // pred_fallthru
        _
    $region40: #{conv_or_deconv_block.3} parent=5 // pred_fallthru
      _
  $region6: #{conv_or_deconv_block.3} parent=0 // loop_footer
    %s13 = sadd.s32 1, %s9
  $region7: #{conv_or_deconv_block.3} parent=0 // loop_footer_branch
    %8 = sbr.rel target = $region3
  $region8: #{conv_or_deconv_block.3} parent=0 // loop_exit
    _

</llo_original>
